<compile_context>
chip_gen: v7x
topology: tpu7x:2x2x1
jax: 0.10.0
libtpu: 0.0.40
codegen_flags: <defaults>
</compile_context>

<pallas_src>
import math

import jax
import jax.numpy as jnp
from jax.experimental import pallas as pl
from jax.experimental.pallas import tpu as pltpu


def _round_up(n, m):
    return ((n + m - 1) // m) * m


def _cdiv(a, b):
    return (a + b - 1) // b


def _erf_approx(x):
    """A&S 7.1.26 erf approximation (|abs err| < 1.5e-7), f32 math.

    Built only from mul/add/exp/reciprocal/where; exp and the approximate
    reciprocal both lower to the EUP, leaving the VALU slots free.
    """
    a1, a2, a3, a4, a5 = (0.254829592, -0.284496736, 1.421413741,
                          -1.453152027, 1.061405429)
    p = 0.3275911
    ax = jnp.abs(x)
    t = pl.reciprocal(1.0 + p * ax, approx=True)
    poly = ((((a5 * t + a4) * t + a3) * t + a2) * t + a1) * t
    r = 1.0 - poly * jnp.exp(-ax * ax)
    return jnp.where(x < 0.0, -r, r)


def _gelu_exact(x):
    """Exact GELU: 0.5*x*(1+erf(x/sqrt(2))) — matches torch.nn.GELU() default."""
    return 0.5 * x * (1.0 + _erf_approx(x * (1.0 / math.sqrt(2.0))))


def mlp_kernel(x_ref, w1_ref, b1_ref, w2_ref, b2_ref, o_ref, acc_ref):
    """Grid = (row tiles, hidden tiles); row axis parallel, hidden arbitrary."""
    h_idx = pl.program_id(1)

    @pl.when(h_idx == 0)
    def _():
        acc_ref[...] = jnp.zeros_like(acc_ref)

    # First linear: (tm, E) @ (E, th) on the MXU — bf16 inputs, f32 accumulate.
    x = x_ref[...].astype(w1_ref.dtype)
    h = jnp.dot(x, w1_ref[...], preferred_element_type=jnp.float32)
    h = h + b1_ref[...].astype(jnp.float32)

    # GELU in f32 on this hidden tile.
    h = _gelu_exact(h)

    # Second linear: accumulate (tm, th) @ (th, E) into the f32 accumulator.
    acc_ref[...] += jnp.dot(h.astype(w2_ref.dtype), w2_ref[...],
                            preferred_element_type=jnp.float32)

    @pl.when(h_idx == pl.num_programs(1) - 1)
    def _():
        out = acc_ref[...] + b2_ref[...].astype(jnp.float32)
        o_ref[...] = out.astype(o_ref.dtype)


def mlp_forward(x, params, *, block_rows=256, block_hidden=512,
                mxu_dtype=jnp.bfloat16):
    """x: (..., n_embd).  params: w1 (E,H), b1 (1,H), w2 (H,E), b2 (1,E)."""
    orig_shape = x.shape
    E = orig_shape[-1]
    M = int(math.prod(orig_shape[:-1]))
    H = params["w1"].shape[1]

    # Weights in the MXU-native input dtype; biases stay f32 (added post-acc).
    w1 = params["w1"].astype(mxu_dtype)
    w2 = params["w2"].astype(mxu_dtype)
    b1 = params["b1"].astype(jnp.float32)
    b2 = params["b2"].astype(jnp.float32)

    x2 = x.reshape(M, E)

    # Row tile: multiple of 16 (bf16 sublane packing).  Prefer >= 2 row tiles
    # when M allows so the "parallel" axis can shard across v7x's 2 TCs.
    tm = min(block_rows, _round_up(M, 16))
    if tm >= M and M > 32:
        tm = _round_up(_cdiv(M, 2), 16)
    grid_m = _cdiv(M, tm)              # ragged last row-tile handled by Pallas

    # Hidden tile: full H when small, otherwise stream (E,th)/(th,E) weight
    # tiles.  Pad weights/bias along H with zeros (gelu(0) == 0 -> no effect).
    if H <= block_hidden:
        th, h_pad = H, H
    else:
        th = block_hidden              # multiple of 128
        h_pad = _round_up(H, th)
        if h_pad != H:
            w1 = jnp.pad(w1, ((0, 0), (0, h_pad - H)))
            b1 = jnp.pad(b1, ((0, 0), (0, h_pad - H)))
            w2 = jnp.pad(w2, ((0, h_pad - H), (0, 0)))
    grid_h = h_pad // th

    # Explicit VMEM budget (double-buffered ins/outs + f32 accumulator).
    in_bytes = jnp.dtype(x.dtype).itemsize
    w_bytes = jnp.dtype(mxu_dtype).itemsize
    vmem_est = (2 * (tm * E * in_bytes            # x tile
                     + tm * E * in_bytes          # out tile
                     + E * th * w_bytes + th * 4  # w1 + b1 tiles
                     + th * E * w_bytes + E * 4)  # w2 + b2
                + tm * E * 4)                     # accumulator scratch
    vmem_limit = int(min(max(vmem_est + (8 << 20), 16 << 20), 48 << 20))

    out = pl.pallas_call(
        mlp_kernel,
        out_shape=jax.ShapeDtypeStruct((M, E), x.dtype),
        grid_spec=pltpu.PrefetchScalarGridSpec(
            num_scalar_prefetch=0,
            grid=(grid_m, grid_h),
            in_specs=[
                pl.BlockSpec((tm, E), lambda i, h: (i, 0)),   # x row tile
                pl.BlockSpec((E, th), lambda i, h: (0, h)),   # w1 column tile
                pl.BlockSpec((1, th), lambda i, h: (0, h)),   # b1 tile
                pl.BlockSpec((th, E), lambda i, h: (h, 0)),   # w2 row tile
                pl.BlockSpec((1, E), lambda i, h: (0, 0)),    # b2 (constant)
            ],
            out_specs=pl.BlockSpec((tm, E), lambda i, h: (i, 0)),
            scratch_shapes=[pltpu.VMEM((tm, E), jnp.float32)],
        ),
        compiler_params=pltpu.CompilerParams(
            dimension_semantics=("parallel", "arbitrary"),
            vmem_limit_bytes=vmem_limit),
    )(x2, w1, b1, w2, b2)

    return out.reshape(orig_shape)


def reference(x, params):
    """Pure-JAX f32 reference mirroring the PyTorch forward exactly."""
    h = x @ params["w1"] + params["b1"]
    h = jax.nn.gelu(h, approximate=False)    # torch.nn.GELU() default = exact
    return h @ params["w2"] + params["b2"]


if __name__ == "__main__":
    # Small shapes consistent with the module: batch=2, seq=8, n_embd=32, hidden=128.
    B, L, E, H = 2, 8, 32, 128

    key = jax.random.PRNGKey(0)
    ks = jax.random.split(key, 5)
    s1 = 1.0 / math.sqrt(E)
    s2 = 1.0 / math.sqrt(H)

    # Deterministic synthetic parameters (nn.Linear weights stored as (in, out)).
    params = {
        "w1": jax.random.uniform(ks[0], (E, H), jnp.float32, -s1, s1),
        "b1": jax.random.uniform(ks[1], (1, H), jnp.float32, -s1, s1),
        "w2": jax.random.uniform(ks[2], (H, E), jnp.float32, -s2, s2),
        "b2": jax.random.uniform(ks[3], (1, E), jnp.float32, -s2, s2),
    }
    x = jax.random.normal(ks[4], (B, L, E), jnp.float32)

    out = jax.block_until_ready(mlp_forward(x, params))
    ref = reference(x, params)

    assert out.shape == (B, L, E)
    # Tolerance covers bf16 MXU inputs (f32 accumulate) + ~1.5e-7 erf approx.
    assert jnp.allclose(out, ref, atol=2e-2, rtol=2e-2), (
        "mismatch vs JAX reference, max abs err "
        f"{float(jnp.max(jnp.abs(out - ref))):.3e}")

    print("KERNEL_OK")
</pallas_src>

<mosaic_0001>
module attributes {stable_mosaic.version = 11 : i64} {
  func.func @mlp_kernel(%arg0: i32, %arg1: i32, %arg2: memref<16x32xf32, #tpu.memory_space<vmem>>, %arg3: memref<32x128xbf16, #tpu.memory_space<vmem>>, %arg4: memref<1x128xf32, #tpu.memory_space<vmem>>, %arg5: memref<128x32xbf16, #tpu.memory_space<vmem>>, %arg6: memref<1x32xf32, #tpu.memory_space<vmem>>, %arg7: memref<16x32xf32, #tpu.memory_space<vmem>>, %arg8: memref<16x32xf32, #tpu.memory_space<vmem>>) attributes {dimension_semantics = [#tpu.dimension_semantics<parallel>, #tpu.dimension_semantics<arbitrary>], iteration_bounds = array<i64: 1, 1>, scalar_prefetch = 0 : i64, scratch_operands = 1 : i64, tpu.core_type = #tpu.core_type<tc>, window_params = [{transform_indices = @transform_0, window_bounds = array<i64: 16, 32>}, {transform_indices = @transform_1, window_bounds = array<i64: 32, 128>}, {transform_indices = @transform_2, window_bounds = array<i64: 1, 128>}, {transform_indices = @transform_3, window_bounds = array<i64: 128, 32>}, {pipeline_mode = #tpu.pipeline_mode<synchronous>, transform_indices = @transform_4, window_bounds = array<i64: 1, 32>}, {transform_indices = @transform_5, window_bounds = array<i64: 16, 32>}]} {
    %c0_i32 = arith.constant 0 : i32
    %0 = arith.cmpi eq, %arg1, %c0_i32 : i32
    %1 = arith.extui %0 : i1 to i32
    %c0_i32_0 = arith.constant 0 : i32
    %2 = arith.cmpi ne, %1, %c0_i32_0 : i32
    scf.if %2 {
      %cst_29 = arith.constant 0.000000e+00 : f32
      %58 = vector.broadcast %cst_29 : f32 to vector<16x32xf32>
      %c0_30 = arith.constant 0 : index
      %c0_31 = arith.constant 0 : index
      %59 = vector.load %arg8[%c0_30, %c0_31] : memref<16x32xf32, #tpu.memory_space<vmem>>, vector<16x32xf32>
      tpu.vector_store %arg8[%c0_30, %c0_31], %58 {strides = array<i32>} : memref<16x32xf32, #tpu.memory_space<vmem>>, vector<16x32xf32>,
    } else {
    }
    %c0 = arith.constant 0 : index
    %c0_1 = arith.constant 0 : index
    %3 = vector.load %arg2[%c0, %c0_1] : memref<16x32xf32, #tpu.memory_space<vmem>>, vector<16x32xf32>
    %4 = arith.truncf %3 : vector<16x32xf32> to vector<16x32xbf16>
    %c0_2 = arith.constant 0 : index
    %c0_3 = arith.constant 0 : index
    %5 = vector.load %arg3[%c0_2, %c0_3] : memref<32x128xbf16, #tpu.memory_space<vmem>>, vector<32x128xbf16>
    %cst = arith.constant dense<0.000000e+00> : vector<16x128xf32>
    %6 = tpu.matmul %4, %5, %cst {dimension_numbers = #tpu.dot_dimension_numbers<[1], [0], [0], [1], [0, 0, 1, 1], [], []>} : vector<16x32xbf16>, vector<32x128xbf16>, vector<16x128xf32> -> vector<16x128xf32>
    %c0_4 = arith.constant 0 : index
    %c0_5 = arith.constant 0 : index
    %7 = vector.load %arg4[%c0_4, %c0_5] : memref<1x128xf32, #tpu.memory_space<vmem>>, vector<1x128xf32>
    %8 = vector.broadcast %7 : vector<1x128xf32> to vector<16x128xf32>
    %9 = arith.addf %6, %8 : vector<16x128xf32>
    %cst_6 = arith.constant 5.000000e-01 : f32
    %10 = vector.broadcast %cst_6 : f32 to vector<16x128xf32>
    %11 = arith.mulf %10, %9 : vector<16x128xf32>
    %cst_7 = arith.constant 0.707106769 : f32
    %12 = vector.broadcast %cst_7 : f32 to vector<16x128xf32>
    %13 = arith.mulf %9, %12 : vector<16x128xf32>
    %14 = math.absf %13 : vector<16x128xf32>
    %cst_8 = arith.constant 0.327591091 : f32
    %15 = vector.broadcast %cst_8 : f32 to vector<16x128xf32>
    %16 = arith.mulf %15, %14 : vector<16x128xf32>
    %cst_9 = arith.constant 1.000000e+00 : f32
    %17 = vector.broadcast %cst_9 : f32 to vector<16x128xf32>
    %18 = arith.addf %17, %16 : vector<16x128xf32>
    %19 = tpu.reciprocal %18 {approx = true} : vector<16x128xf32> -> vector<16x128xf32>
    %cst_10 = arith.constant 1.06140542 : f32
    %20 = vector.broadcast %cst_10 : f32 to vector<16x128xf32>
    %21 = arith.mulf %20, %19 : vector<16x128xf32>
    %cst_11 = arith.constant -1.45315206 : f32
    %22 = vector.broadcast %cst_11 : f32 to vector<16x128xf32>
    %23 = arith.addf %21, %22 : vector<16x128xf32>
    %24 = arith.mulf %23, %19 : vector<16x128xf32>
    %cst_12 = arith.constant 1.42141378 : f32
    %25 = vector.broadcast %cst_12 : f32 to vector<16x128xf32>
    %26 = arith.addf %24, %25 : vector<16x128xf32>
    %27 = arith.mulf %26, %19 : vector<16x128xf32>
    %cst_13 = arith.constant -0.284496725 : f32
    %28 = vector.broadcast %cst_13 : f32 to vector<16x128xf32>
    %29 = arith.addf %27, %28 : vector<16x128xf32>
    %30 = arith.mulf %29, %19 : vector<16x128xf32>
    %cst_14 = arith.constant 0.254829586 : f32
    %31 = vector.broadcast %cst_14 : f32 to vector<16x128xf32>
    %32 = arith.addf %30, %31 : vector<16x128xf32>
    %33 = arith.mulf %32, %19 : vector<16x128xf32>
    %cst_15 = arith.constant 0.000000e+00 : f32
    %34 = vector.broadcast %cst_15 : f32 to vector<16x128xf32>
    %35 = arith.subf %34, %14 : vector<16x128xf32>
    %36 = arith.mulf %35, %14 : vector<16x128xf32>
    %37 = math.exp %36 : vector<16x128xf32>
    %38 = arith.mulf %33, %37 : vector<16x128xf32>
    %cst_16 = arith.constant 1.000000e+00 : f32
    %39 = vector.broadcast %cst_16 : f32 to vector<16x128xf32>
    %40 = arith.subf %39, %38 : vector<16x128xf32>
    %cst_17 = arith.constant 0.000000e+00 : f32
    %41 = vector.broadcast %cst_17 : f32 to vector<16x128xf32>
    %42 = arith.cmpf olt, %13, %41 : vector<16x128xf32>
    %cst_18 = arith.constant 0.000000e+00 : f32
    %43 = vector.broadcast %cst_18 : f32 to vector<16x128xf32>
    %44 = arith.subf %43, %40 : vector<16x128xf32>
    %45 = arith.select %42, %44, %40 : vector<16x128xi1>, vector<16x128xf32>
    %cst_19 = arith.constant 1.000000e+00 : f32
    %46 = vector.broadcast %cst_19 : f32 to vector<16x128xf32>
    %47 = arith.addf %46, %45 : vector<16x128xf32>
    %48 = arith.mulf %11, %47 : vector<16x128xf32>
    %c0_20 = arith.constant 0 : index
    %c0_21 = arith.constant 0 : index
    %49 = vector.load %arg8[%c0_20, %c0_21] : memref<16x32xf32, #tpu.memory_space<vmem>>, vector<16x32xf32>
    %50 = arith.truncf %48 : vector<16x128xf32> to vector<16x128xbf16>
    %c0_22 = arith.constant 0 : index
    %c0_23 = arith.constant 0 : index
    %51 = vector.load %arg5[%c0_22, %c0_23] : memref<128x32xbf16, #tpu.memory_space<vmem>>, vector<128x32xbf16>
    %cst_24 = arith.constant dense<0.000000e+00> : vector<16x32xf32>
    %52 = tpu.matmul %50, %51, %cst_24 {dimension_numbers = #tpu.dot_dimension_numbers<[1], [0], [0], [1], [0, 0, 1, 1], [], []>} : vector<16x128xbf16>, vector<128x32xbf16>, vector<16x32xf32> -> vector<16x32xf32>
    %53 = arith.addf %49, %52 : vector<16x32xf32>
    %c0_25 = arith.constant 0 : index
    %c0_26 = arith.constant 0 : index
    %54 = vector.load %arg8[%c0_25, %c0_26] : memref<16x32xf32, #tpu.memory_space<vmem>>, vector<16x32xf32>
    tpu.vector_store %arg8[%c0_25, %c0_26], %53 {strides = array<i32>} : memref<16x32xf32, #tpu.memory_space<vmem>>, vector<16x32xf32>,
    %c0_i32_27 = arith.constant 0 : i32
    %55 = arith.cmpi eq, %arg1, %c0_i32_27 : i32
    %56 = arith.extui %55 : i1 to i32
    %c0_i32_28 = arith.constant 0 : i32
    %57 = arith.cmpi ne, %56, %c0_i32_28 : i32
    scf.if %57 {
      %c0_29 = arith.constant 0 : index
      %c0_30 = arith.constant 0 : index
      %58 = vector.load %arg8[%c0_29, %c0_30] : memref<16x32xf32, #tpu.memory_space<vmem>>, vector<16x32xf32>
      %c0_31 = arith.constant 0 : index
      %c0_32 = arith.constant 0 : index
      %59 = vector.load %arg6[%c0_31, %c0_32] : memref<1x32xf32, #tpu.memory_space<vmem>>, vector<1x32xf32>
      %60 = vector.broadcast %59 : vector<1x32xf32> to vector<16x32xf32>
      %61 = arith.addf %58, %60 : vector<16x32xf32>
      %c0_33 = arith.constant 0 : index
      %c0_34 = arith.constant 0 : index
      %62 = vector.load %arg7[%c0_33, %c0_34] : memref<16x32xf32, #tpu.memory_space<vmem>>, vector<16x32xf32>
      tpu.vector_store %arg7[%c0_33, %c0_34], %61 {strides = array<i32>} : memref<16x32xf32, #tpu.memory_space<vmem>>, vector<16x32xf32>,
    } else {
    }
    return
  }
  func.func @transform_0(%arg0: i32, %arg1: i32) -> (i32, i32) {
    %c0_i32 = arith.constant 0 : i32
    %c0_i32_0 = arith.constant 0 : i32
    return %arg0, %c0_i32 : i32, i32
  }
  func.func @transform_1(%arg0: i32, %arg1: i32) -> (i32, i32) {
    %c0_i32 = arith.constant 0 : i32
    %c0_i32_0 = arith.constant 0 : i32
    return %c0_i32, %arg1 : i32, i32
  }
  func.func @transform_2(%arg0: i32, %arg1: i32) -> (i32, i32) {
    %c0_i32 = arith.constant 0 : i32
    %c0_i32_0 = arith.constant 0 : i32
    return %c0_i32, %arg1 : i32, i32
  }
  func.func @transform_3(%arg0: i32, %arg1: i32) -> (i32, i32) {
    %c0_i32 = arith.constant 0 : i32
    %c0_i32_0 = arith.constant 0 : i32
    return %arg1, %c0_i32 : i32, i32
  }
  func.func @transform_4(%arg0: i32, %arg1: i32) -> (i32, i32) {
    %c0_i32 = arith.constant 0 : i32
    %c0_i32_0 = arith.constant 0 : i32
    %c0_i32_1 = arith.constant 0 : i32
    return %c0_i32, %c0_i32_0 : i32, i32
  }
  func.func @transform_5(%arg0: i32, %arg1: i32) -> (i32, i32) {
    %c0_i32 = arith.constant 0 : i32
    %c0_i32_0 = arith.constant 0 : i32
    return %arg0, %c0_i32 : i32, i32
  }
}

</mosaic_0001>

<llo_original>
// kernel: tpu_custom_call.1
$region0: #{tpu_custom_call.1}
  #allocation0 [shape = 'u32[]', space=smem, size = 0x4, offset = 0x4, fixed_abs, tag = 'smem constant byte address 0x4 - core index']
  #allocation1 [shape = 'u32[144,128]{1,0:T(1,128)}', space=vmem, size = 0x12000, scoped, tag = 'internal scratch']
  #allocation2 [shape = 'f32[16,32]{1,0:T(8,128)}', space=vmem, size = 0x2000, scoped, tag = 'scratch operand']
  %s0 = inlined_call_operand.vmem [shape: f32[16,32], index: 0, kind: input, shape index: {}]
  %s1 = inlined_call_operand.vmem [shape: bf16[32,128], index: 1, kind: input, shape index: {}]
  %s2 = inlined_call_operand.vmem [shape: f32[1,128], index: 2, kind: input, shape index: {}]
  %s3 = inlined_call_operand.vmem [shape: bf16[128,32], index: 3, kind: input, shape index: {}]
  %s4 = inlined_call_operand.vmem [shape: f32[1,32], index: 4, kind: input, shape index: {}]
  %s5 = inlined_call_operand.hbm [shape: f32[16,32], index: 5, kind: output, shape index: {}]
  %s6 = sld [smem:[#allocation0]]
  $region38: #{tpu_custom_call.1} parent=0
    _
  %s8 = ssub.s32 1, %s6
  %s9 = scalar_select 0, %s8, %s6
  $region1: #{tpu_custom_call.1} parent=0
    #allocation3 [shape = 'u8[8192]{0}', space=vmem, size = 0x2000, scoped, tag = 'output window, operand 0, single buffered']
    #allocation4 [shape = 's32[1]{0}', space=sflag, size = 0x4, scoped, tag = 'scoped memory for tpu_custom_call.1']
    %10 = vsyncpa [#allocation4], 0
    // Predicated region
    $region2: #{tpu_custom_call.1} parent=1 // pred_check
      _
    $region3: #{tpu_custom_call.1} parent=1 // pred_check_branch
      %12 = sbr.rel (0) target = $region5
    $region4: #{tpu_custom_call.1} parent=1 // pred_region
      _
    $region5: #{tpu_custom_call.1} parent=1 // pred_fallthru
      _
    // Predicated region
    $region6: #{tpu_custom_call.1} parent=1 // pred_check
      _
    $region7: #{tpu_custom_call.1} parent=1 // pred_check_branch
      %14 = sbr.rel (0) target = $region9
    $region8: #{tpu_custom_call.1} parent=1 // pred_region
      _
    $region9: #{tpu_custom_call.1} parent=1 // pred_fallthru
      _
    // Predicated region
    $region10: #{tpu_custom_call.1} parent=1 // pred_check
      _
    $region11: #{tpu_custom_call.1} parent=1 // pred_check_branch
      %16 = sbr.rel (0) target = $region13
    $region12: #{tpu_custom_call.1} parent=1 // pred_region
      _
    $region13: #{tpu_custom_call.1} parent=1 // pred_fallthru
      _
    // Predicated region
    $region14: #{tpu_custom_call.1} parent=1 // pred_check
      _
    $region15: #{tpu_custom_call.1} parent=1 // pred_check_branch
      %18 = sbr.rel (0) target = $region17
    $region16: #{tpu_custom_call.1} parent=1 // pred_region
      _
    $region17: #{tpu_custom_call.1} parent=1 // pred_fallthru
      _
    // Predicated region
    $region18: #{tpu_custom_call.1} parent=1 // pred_check
      _
    $region19: #{tpu_custom_call.1} parent=1 // pred_check_branch
      %20 = sbr.rel (0) target = $region21
    $region20: #{tpu_custom_call.1} parent=1 // pred_region
      _
    $region21: #{tpu_custom_call.1} parent=1 // pred_fallthru
      _
    %p22 = scmp.eq.s32.totalorder 0, 0
    // Predicated region
    $region22: #{tpu_custom_call.1} parent=1 // pred_check
      %p23 = pneg %p22
    $region23: #{tpu_custom_call.1} parent=1 // pred_check_branch
      %25 = sbr.rel (%p23) target = $region25
    $region24: #{tpu_custom_call.1} parent=1 // pred_region
      %vm26 = vcmask 261120
      %27 = vst.msk [vmem:[#allocation2] sm:$0xff] %vm26, 0.0
      %28 = vst.msk [vmem:[#allocation2 + $0x8] sm:$0xff] %vm26, 0.0
    $region25: #{tpu_custom_call.1} parent=1 // pred_fallthru
      _
    %v29 = vld [vmem:[%s0] sm:$0xff]
    %v30 = vld [vmem:[%s0 + $0x8] sm:$0xff]
    %v31 = vpack.c.bf16 %v30, %v29
    %v32 = vld [vmem:[%s1] sm:$0xf]
    %v33 = vld [vmem:[%s1 + $0x4] sm:$0xf]
    %v34 = vld [vmem:[%s1 + $0x8] sm:$0xf]
    %v35 = vld [vmem:[%s1 + $0xc] sm:$0xf]
    %v36 = vld [vmem:[%s2] sm:$0x1]
    %v38 = vlaneseq
    %v39 = vshrl.u32 %v38, 7
    %v40 = vsub.s32 0, %v39
    %v41 = vrot.slane %v36, %v40
    %v47 = vunpack.c.l.b16 %v32
    %v48 = vunpack.c.l.b16 %v33
    %v49 = vunpack.c.l.b16 %v34
    %v50 = vunpack.c.l.b16 %v35
    %v51 = vpack.c.b16 %v48, %v47
    %v52 = vpack.c.b16 %v50, %v49
    %vm55 = vcmask 261120
    %v57 = vsel %vm55, %v31, 0
    %59 = vmatprep.subr.bf16.mxu0 0
    %60 = vmatpush1.bf16.msra.mxu0 %v51
    %61 = vmatprep.subr.bf16.mxu0 0
    %62 = vmatpush1.bf16.msra.mxu0 %v52
    %63 = vmatprep.subr.bf16.mxu0 0
    %64 = vmatpush1.bf16.msra.mxu0 0
    %65 = vmatprep.subr.bf16.mxu0 0
    %66 = vmatpush1.bf16.msra.mxu0 0
    %67 = vmatprep.subr.bf16.mxu0 0
    %68 = vmatpush1.bf16.msra.mxu0 0
    %69 = vmatprep.subr.bf16.mxu0 0
    %70 = vmatpush1.bf16.msra.mxu0 0
    %71 = vmatprep.subr.bf16.mxu0 0
    %72 = vmatpush1.bf16.msra.mxu0 0
    %73 = vmatprep.subr.bf16.mxu0 0
    %74 = vmatpush1.bf16.msra.mxu0 0
    %75 = vmatprep.subr.bf16.mxu0 0
    %76 = vmatpush1.bf16.msra.mxu0 0
    %77 = vmatprep.subr.bf16.mxu0 0
    %78 = vmatpush1.bf16.msra.mxu0 0
    %79 = vmatprep.subr.bf16.mxu0 0
    %80 = vmatpush1.bf16.msra.mxu0 0
    %81 = vmatprep.subr.bf16.mxu0 0
    %82 = vmatpush1.bf16.msra.mxu0 0
    %83 = vmatprep.subr.bf16.mxu0 0
    %84 = vmatpush1.bf16.msra.mxu0 0
    %85 = vmatprep.subr.bf16.mxu0 0
    %86 = vmatpush1.bf16.msra.mxu0 0
    %87 = vmatprep.subr.bf16.mxu0 0
    %88 = vmatpush1.bf16.msra.mxu0 0
    %89 = vmatprep.subr.bf16.mxu0 0
    %90 = vmatpush1.bf16.msra.mxu0 0
    %91 = vmatprep.mubr.bf16.mxu0 0
    %92 = vmatmul.mubr.bf16.gmra.mrb[0].mxu0 %v57
    %v93 = vpop.f32.mrb[0].mxu0
    %v94 = vadd.f32 %v41, %v93
    %v95 = vpop.f32.mrb[0].mxu0
    %v96 = vpop.f32.mrb[0].mxu0
    %v97 = vadd.f32 %v41, %v96
    %v98 = vpop.f32.mrb[0].mxu0
    %99 = vdwg.mxu0
    %v100 = vmul.f32 %v94, 0.5
    %v101 = vmul.f32 %v97, 0.5
    %v102 = vmul.f32 %v94, 0.70710677
    %v103 = vmul.f32 %v97, 0.70710677
    %v104 = vand.u32 2147483647, %v102
    %v105 = vand.u32 2147483647, %v103
    %v106 = vmul.f32 %v104, 0.3275911
    %v107 = vmul.f32 %v105, 0.3275911
    %v108 = vadd.f32 %v106, 1.0
    %v109 = vadd.f32 %v107, 1.0
    %v110 = vrcp.pop %v108
    %v111 = vrcp.pop %v109
    %v112 = vmul.f32 %v110, 1.0614054
    %v113 = vmul.f32 %v111, 1.0614054
    %v114 = vadd.f32 %v112, -1.4531521
    %v115 = vadd.f32 %v113, -1.4531521
    %v116 = vmul.f32 %v114, %v110
    %v117 = vmul.f32 %v115, %v111
    %v118 = vadd.f32 %v116, 1.4214138
    %v119 = vadd.f32 %v117, 1.4214138
    %v120 = vmul.f32 %v118, %v110
    %v121 = vmul.f32 %v119, %v111
    %v122 = vadd.f32 %v120, -0.28449672
    %v123 = vadd.f32 %v121, -0.28449672
    %v124 = vmul.f32 %v122, %v110
    %v125 = vmul.f32 %v123, %v111
    %v126 = vadd.f32 %v124, 0.2548296
    %v127 = vadd.f32 %v125, 0.2548296
    %v128 = vmul.f32 %v126, %v110
    %v129 = vmul.f32 %v127, %v111
    %v130 = vsub.f32 0.0, %v104
    %v131 = vsub.f32 0.0, %v105
    %v132 = vmul.f32 %v130, %v104
    %v133 = vmul.f32 %v131, %v105
    %v134 = vmul.f32 %v132, 1.442695
    %v135 = vpow.pop %v134
    %v136 = vmul.f32 %v133, 1.442695
    %v137 = vpow.pop %v136
    %v138 = vmul.f32 %v128, %v135
    %v139 = vmul.f32 %v129, %v137
    %v140 = vsub.f32 1.0, %v138
    %v141 = vsub.f32 1.0, %v139
    %vm142 = vcmp.lt.f32.partialorder %v102, 0.0
    %vm143 = vcmp.lt.f32.partialorder %v103, 0.0
    %v144 = vsub.f32 0.0, %v140
    %v145 = vsub.f32 0.0, %v141
    %v146 = vsel %vm142, %v144, %v140
    %v147 = vsel %vm143, %v145, %v141
    %v148 = vadd.f32 %v146, 1.0
    %v149 = vadd.f32 %v147, 1.0
    %v150 = vmul.f32 %v100, %v148
    %v151 = vmul.f32 %v101, %v149
    %v152 = vld [vmem:[#allocation2] sm:$0xff]
    %v153 = vld [vmem:[#allocation2 + $0x8] sm:$0xff]
    %v154 = vpack.c.bf16 %v151, %v150
    %v155 = vld [vmem:[%s3] sm:$0xf]
    %v156 = vld [vmem:[%s3 + $0x4] sm:$0xf]
    %v157 = vld [vmem:[%s3 + $0x8] sm:$0xf]
    %v158 = vld [vmem:[%s3 + $0xc] sm:$0xf]
    %v159 = vld [vmem:[%s3 + $0x10] sm:$0xf]
    %v160 = vld [vmem:[%s3 + $0x14] sm:$0xf]
    %v161 = vld [vmem:[%s3 + $0x18] sm:$0xf]
    %v162 = vld [vmem:[%s3 + $0x1c] sm:$0xf]
    %v163 = vld [vmem:[%s3 + $0x20] sm:$0xf]
    %v164 = vld [vmem:[%s3 + $0x24] sm:$0xf]
    %v165 = vld [vmem:[%s3 + $0x28] sm:$0xf]
    %v166 = vld [vmem:[%s3 + $0x2c] sm:$0xf]
    %v167 = vld [vmem:[%s3 + $0x30] sm:$0xf]
    %v168 = vld [vmem:[%s3 + $0x34] sm:$0xf]
    %v169 = vld [vmem:[%s3 + $0x38] sm:$0xf]
    %v170 = vld [vmem:[%s3 + $0x3c] sm:$0xf]
    %v187 = vunpack.c.l.b16 %v155
    %v188 = vunpack.c.l.b16 %v156
    %v189 = vunpack.c.l.b16 %v157
    %v190 = vunpack.c.l.b16 %v158
    %v191 = vunpack.c.l.b16 %v159
    %v192 = vunpack.c.l.b16 %v160
    %v193 = vunpack.c.l.b16 %v161
    %v194 = vunpack.c.l.b16 %v162
    %v195 = vunpack.c.l.b16 %v163
    %v196 = vunpack.c.l.b16 %v164
    %v197 = vunpack.c.l.b16 %v165
    %v198 = vunpack.c.l.b16 %v166
    %v199 = vunpack.c.l.b16 %v167
    %v200 = vunpack.c.l.b16 %v168
    %v201 = vunpack.c.l.b16 %v169
    %v202 = vunpack.c.l.b16 %v170
    %v203 = vpack.c.b16 %v188, %v187
    %v204 = vpack.c.b16 %v190, %v189
    %v205 = vpack.c.b16 %v192, %v191
    %v206 = vpack.c.b16 %v194, %v193
    %v207 = vpack.c.b16 %v196, %v195
    %v208 = vpack.c.b16 %v198, %v197
    %v209 = vpack.c.b16 %v200, %v199
    %v210 = vpack.c.b16 %v202, %v201
    %219 = vmatprep.subr.bf16.mxu0 0
    %220 = vmatpush1.bf16.msra.mxu0 %v203
    %221 = vmatprep.subr.bf16.mxu0 0
    %222 = vmatpush1.bf16.msra.mxu0 %v204
    %223 = vmatprep.subr.bf16.mxu0 0
    %224 = vmatpush1.bf16.msra.mxu0 %v205
    %225 = vmatprep.subr.bf16.mxu0 0
    %226 = vmatpush1.bf16.msra.mxu0 %v206
    %227 = vmatprep.subr.bf16.mxu0 0
    %228 = vmatpush1.bf16.msra.mxu0 %v207
    %229 = vmatprep.subr.bf16.mxu0 0
    %230 = vmatpush1.bf16.msra.mxu0 %v208
    %231 = vmatprep.subr.bf16.mxu0 0
    %232 = vmatpush1.bf16.msra.mxu0 %v209
    %233 = vmatprep.subr.bf16.mxu0 0
    %234 = vmatpush1.bf16.msra.mxu0 %v210
    %235 = vmatprep.subr.bf16.mxu0 0
    %236 = vmatpush1.bf16.msra.mxu0 0
    %237 = vmatprep.subr.bf16.mxu0 0
    %238 = vmatpush1.bf16.msra.mxu0 0
    %239 = vmatprep.subr.bf16.mxu0 0
    %240 = vmatpush1.bf16.msra.mxu0 0
    %241 = vmatprep.subr.bf16.mxu0 0
    %242 = vmatpush1.bf16.msra.mxu0 0
    %243 = vmatprep.subr.bf16.mxu0 0
    %244 = vmatpush1.bf16.msra.mxu0 0
    %245 = vmatprep.subr.bf16.mxu0 0
    %246 = vmatpush1.bf16.msra.mxu0 0
    %247 = vmatprep.subr.bf16.mxu0 0
    %248 = vmatpush1.bf16.msra.mxu0 0
    %249 = vmatprep.subr.bf16.mxu0 0
    %250 = vmatpush1.bf16.msra.mxu0 0
    %251 = vmatprep.mubr.bf16.mxu0 0
    %252 = vmatmul.mubr.bf16.gmra.mrb[0].mxu0 %v154
    %v253 = vpop.f32.mrb[0].mxu0
    %v254 = vadd.f32 0.0, %v253
    %v255 = vpop.f32.mrb[0].mxu0
    %v256 = vpop.f32.mrb[0].mxu0
    %v257 = vadd.f32 0.0, %v256
    %v258 = vpop.f32.mrb[0].mxu0
    %259 = vdwg.mxu0
    %v260 = vadd.f32 %v152, %v254
    %v261 = vadd.f32 %v153, %v257
    %262 = vst.msk [vmem:[#allocation2] sm:$0xff] %vm55, %v260
    %263 = vst.msk [vmem:[#allocation2 + $0x8] sm:$0xff] %vm55, %v261
    // Predicated region
    $region26: #{tpu_custom_call.1} parent=1 // pred_check
      %p264 = pneg %p22
    $region27: #{tpu_custom_call.1} parent=1 // pred_check_branch
      %266 = sbr.rel (%p264) target = $region29
    $region28: #{tpu_custom_call.1} parent=1 // pred_region
      %v267 = vld [vmem:[#allocation2] sm:$0xff]
      %v268 = vld [vmem:[#allocation2 + $0x8] sm:$0xff]
      %v269 = vld [vmem:[%s4] sm:$0x1]
      %v271 = vlaneseq
      %v272 = vshrl.u32 %v271, 7
      %v273 = vsub.s32 0, %v272
      %v274 = vrot.slane %v269, %v273
      %v276 = vadd.f32 %v267, %v274
      %v277 = vadd.f32 %v268, %v274
      %278 = vst.msk [vmem:[#allocation3] sm:$0xff] %vm55, %v276
      %279 = vst.msk [vmem:[#allocation3 + $0x8] sm:$0xff] %vm55, %v277
    $region29: #{tpu_custom_call.1} parent=1 // pred_fallthru
      _
    // Predicated region
    $region30: #{tpu_custom_call.1} parent=1 // pred_check
      _
    $region31: #{tpu_custom_call.1} parent=1 // pred_check_branch
      %281 = sbr.rel (0) target = $region33
    $region32: #{tpu_custom_call.1} parent=1 // pred_region
      %s283 = ssub.s32 256, 256
      %284 = vsyncadd [#allocation4], %s283
      %s285 = sshll.u32 [#allocation3], 4
      %s286 = int_to_ptr.vmem [resolvable:$true] %s285
      %291 = dma.vmem_to_hbm [thread:$0]  %s286, 256, %s5, [#allocation4], 128, 128, 8
    $region33: #{tpu_custom_call.1} parent=1 // pred_fallthru
      _
    // Predicated region
    $region34: #{tpu_custom_call.1} parent=1 // pred_check
      _
    $region35: #{tpu_custom_call.1} parent=1 // pred_check_branch
      %293 = sbr.rel (0) target = $region37
    $region36: #{tpu_custom_call.1} parent=1 // pred_region
      %294 = dma.done [#allocation4], 256
    $region37: #{tpu_custom_call.1} parent=1 // pred_fallthru
      _
    %295 = vsyncpa [#allocation4], 1

</llo_original>
